<compile_context>
chip_gen: v7x
topology: tpu7x:2x2x1
jax: 0.10.0
libtpu: 0.0.40
codegen_flags: <defaults>
</compile_context>

<pallas_src>
import functools

import jax
import jax.numpy as jnp
from jax.experimental import pallas as pl
from jax.experimental.pallas import tpu as pltpu


def _upsample_kernel(x_ref, w_ref, b_ref, o_ref, *, stride: int):
    # x_ref: (bb, Cin, F, Tt)  VMEM      w_ref: (Cin, Cout)  SMEM
    # b_ref: (Cout,)           SMEM      o_ref: (bb, Cout, Fout, Tt)  VMEM
    bb, c_in, f_in, tt = x_ref.shape
    _, c_out, f_out, _ = o_ref.shape

    for co in range(c_out):
        # Unrolled VPU FMAs over the (tiny) input-channel axis; weights/bias
        # are SMEM scalars broadcast into the lanes.  Per-channel ref reads
        # keep the live f32 footprint to a single (bb, F, Tt) accumulator.
        acc = x_ref[:, 0, :, :].astype(jnp.float32) * w_ref[0, co]
        for ci in range(1, c_in):
            acc = acc + x_ref[:, ci, :, :].astype(jnp.float32) * w_ref[ci, co]
        acc = acc + b_ref[co]                                   # (bb, F, Tt)

        if stride > 1:
            # Interleave (stride - 1) bias-only rows after every data row
            # along frequency; output_padding rows (< stride) fall out of the
            # same [:f_out] slice.  Single lane-dense store per output plane.
            gap = jnp.full((bb, f_in, stride - 1, tt), b_ref[co], jnp.float32)
            plane = jnp.concatenate([acc.reshape(bb, f_in, 1, tt), gap], axis=2)
            plane = plane.reshape(bb, f_in * stride, tt)[:, :f_out]
        else:
            plane = acc
        o_ref[:, co, :, :] = plane.astype(o_ref.dtype)


def _physical_vmem_bytes() -> int:
    try:
        return int(pltpu.get_tpu_info().vmem_capacity_bytes)
    except Exception:  # conservative fallback if the query is unavailable
        return 128 << 20


def _pick_tiles(B, c_in, c_out, f_in, f_out, T, itemsize, budget):
    """Largest (batch, time) tiles whose real per-step footprint fits budget."""

    def step_bytes(bb, tt):
        # Double-buffered input + output blocks (BlockSpec pipelining) plus
        # the in-kernel f32 temporaries (accumulator + interleaved plane/gap).
        io = 2 * bb * tt * itemsize * (c_in * f_in + c_out * f_out)
        tmp = bb * tt * 4 * (f_in + 2 * f_out)
        return io + tmp

    # Time tiles must be a multiple of 128 or the full T ((8,128) rule).
    t_cands = [T] if T % 128 else [t for t in range(T, 0, -128) if T % t == 0]

    block_b, block_t = B, T
    # Shrink the batch tile first (keeping divisibility) ...
    while block_b > 1 and step_bytes(block_b, block_t) > budget:
        block_b -= 1
        while B % block_b:
            block_b -= 1
    # ... then shrink the time tile in lane-aligned steps.
    if step_bytes(block_b, block_t) > budget:
        for tt in t_cands:
            block_t = tt
            if step_bytes(block_b, tt) <= budget:
                break

    # Guarantee >= 2 grid steps along a parallel axis when shapes allow it, so
    # both of v7x's TensorCores (megacore) get a share of the DMA work.
    def n_steps(bb, tt):
        return (B // bb) * (T // tt)

    while n_steps(block_b, block_t) < 2:
        if block_b > 1:
            nb = block_b // 2
            while B % nb:
                nb -= 1
            block_b = nb
        elif T % 128 == 0 and block_t % 256 == 0:
            block_t //= 2        # even divisor halved still divides T
        else:
            break

    return block_b, block_t, step_bytes(block_b, block_t)


def upsample_forward(x, w, b, *, stride: int, output_padding: int):
    """ConvTranspose2d(kernel=1, stride=(stride, 1), output_padding=(op, 0)).

    x: (B, C_in, F, T); w: (C_in, C_out) or (C_in, C_out, 1, 1); b: (C_out,)
    returns (B, C_out, (F - 1) * stride + 1 + output_padding, T).
    """
    if w.ndim == 4:  # PyTorch ConvTranspose2d weight layout (Cin, Cout, 1, 1)
        w = w.reshape(w.shape[0], w.shape[1])
    B, c_in, f_in, T = x.shape
    c_out = w.shape[1]
    if stride > 1:
        assert 0 <= output_padding < stride
    else:
        assert output_padding == 0
    f_out = (f_in - 1) * stride + 1 + output_padding

    vmem_cap = _physical_vmem_bytes()          # 128 MiB v5e/v6e, 64 MiB v7x
    budget = min(24 << 20, vmem_cap // 4)      # per-grid-step block footprint
    block_b, block_t, step_bytes = _pick_tiles(
        B, c_in, c_out, f_in, f_out, T, x.dtype.itemsize, budget
    )
    vmem_limit = int(min(vmem_cap // 2, max(32 << 20, 2 * step_bytes)))

    itemsize = x.dtype.itemsize
    cost = pl.CostEstimate(
        flops=2 * B * c_in * c_out * f_in * T,
        transcendentals=0,
        bytes_accessed=(
            B * c_in * f_in * T * itemsize          # x read
            + B * c_out * f_out * T * itemsize      # out write
            + (c_in * c_out + c_out) * 4            # weights + bias
        ),
    )

    kernel = functools.partial(_upsample_kernel, stride=stride)
    return pl.pallas_call(
        kernel,
        out_shape=jax.ShapeDtypeStruct((B, c_out, f_out, T), x.dtype),
        grid=(B // block_b, T // block_t),
        in_specs=[
            pl.BlockSpec((block_b, c_in, f_in, block_t), lambda bi, ti: (bi, 0, 0, ti)),
            pl.BlockSpec(memory_space=pltpu.MemorySpace.SMEM),   # weights: scalars
            pl.BlockSpec(memory_space=pltpu.MemorySpace.SMEM),   # bias: scalars
        ],
        out_specs=pl.BlockSpec(
            (block_b, c_out, f_out, block_t), lambda bi, ti: (bi, 0, 0, ti)
        ),
        compiler_params=pltpu.CompilerParams(
            dimension_semantics=("parallel", "parallel"),
            vmem_limit_bytes=vmem_limit,
        ),
        cost_estimate=cost,
    )(x, w.astype(jnp.float32), b.astype(jnp.float32))


if __name__ == "__main__":
    # Small shapes consistent with the module's forward (NCHW).
    B, c_in, c_out = 2, 4, 4
    f_in, T = 16, 8
    stride, output_padding = 2, 1
    f_out = (f_in - 1) * stride + 1 + output_padding   # 32

    key = jax.random.PRNGKey(0)
    kx, kw, kb = jax.random.split(key, 3)
    x = jax.random.normal(kx, (B, c_in, f_in, T), dtype=jnp.float32)
    # ConvTranspose2d parameters: weight (C_in, C_out, 1, 1), bias (C_out,).
    w = 0.1 * jax.random.normal(kw, (c_in, c_out, 1, 1), dtype=jnp.float32)
    b = 0.1 * jax.random.normal(kb, (c_out,), dtype=jnp.float32)

    out = upsample_forward(x, w, b, stride=stride, output_padding=output_padding)
    out = jax.block_until_ready(out)

    # Pure-JAX reference of ConvTranspose2d(kernel=1, stride=(s,1), out_pad=(op,0)).
    w2 = w.reshape(c_in, c_out)
    y_ref = jnp.einsum("bcft,cd->bdft", x, w2) + b.reshape(1, c_out, 1, 1)
    ref = jnp.broadcast_to(b.reshape(1, c_out, 1, 1), (B, c_out, f_out, T))
    ref = ref.at[:, :, : (f_in - 1) * stride + 1 : stride, :].set(y_ref)

    assert out.shape == (B, c_out, f_out, T)
    assert jnp.allclose(out, ref, atol=1e-5, rtol=1e-5)
    print("KERNEL_OK")
</pallas_src>

<mosaic_0001>
module attributes {stable_mosaic.version = 11 : i64} {
  func.func @_upsample_kernel(%arg0: i32, %arg1: i32, %arg2: memref<1x4x16x8xf32, #tpu.memory_space<vmem>>, %arg3: memref<4x4xf32, #tpu.memory_space<smem>>, %arg4: memref<4xf32, #tpu.memory_space<smem>>, %arg5: memref<1x4x32x8xf32, #tpu.memory_space<vmem>>) attributes {dimension_semantics = [#tpu.dimension_semantics<parallel>, #tpu.dimension_semantics<parallel>], iteration_bounds = array<i64: 2, 1>, scalar_prefetch = 0 : i64, scratch_operands = 0 : i64, tpu.core_type = #tpu.core_type<tc>, window_params = [{transform_indices = @transform_0, window_bounds = array<i64: 1, 4, 16, 8>}, {transform_indices = @transform_1, window_bounds = array<i64: 4, 4>}, {transform_indices = @transform_2, window_bounds = array<i64: 4>}, {transform_indices = @transform_3, window_bounds = array<i64: 1, 4, 32, 8>}]} {
    %c0 = arith.constant 0 : index
    %c0_0 = arith.constant 0 : index
    %c0_1 = arith.constant 0 : index
    %c0_2 = arith.constant 0 : index
    %0 = vector.load %arg2[%c0, %c0_0, %c0_1, %c0_2] : memref<1x4x16x8xf32, #tpu.memory_space<vmem>>, vector<1x1x16x8xf32>
    %1 = vector.shape_cast %0 : vector<1x1x16x8xf32> to vector<1x16x8xf32>
    %c0_3 = arith.constant 0 : index
    %c0_4 = arith.constant 0 : index
    %2 = memref.load %arg3[%c0_3, %c0_4] : memref<4x4xf32, #tpu.memory_space<smem>>
    %3 = vector.broadcast %2 : f32 to vector<1x16x8xf32>
    %4 = arith.mulf %1, %3 : vector<1x16x8xf32>
    %c0_5 = arith.constant 0 : index
    %c1 = arith.constant 1 : index
    %c0_6 = arith.constant 0 : index
    %c0_7 = arith.constant 0 : index
    %5 = vector.load %arg2[%c0_5, %c1, %c0_6, %c0_7] : memref<1x4x16x8xf32, #tpu.memory_space<vmem>>, vector<1x1x16x8xf32>
    %6 = vector.shape_cast %5 : vector<1x1x16x8xf32> to vector<1x16x8xf32>
    %c1_8 = arith.constant 1 : index
    %c0_9 = arith.constant 0 : index
    %7 = memref.load %arg3[%c1_8, %c0_9] : memref<4x4xf32, #tpu.memory_space<smem>>
    %8 = vector.broadcast %7 : f32 to vector<1x16x8xf32>
    %9 = arith.mulf %6, %8 : vector<1x16x8xf32>
    %10 = arith.addf %4, %9 : vector<1x16x8xf32>
    %c0_10 = arith.constant 0 : index
    %c2 = arith.constant 2 : index
    %c0_11 = arith.constant 0 : index
    %c0_12 = arith.constant 0 : index
    %11 = vector.load %arg2[%c0_10, %c2, %c0_11, %c0_12] : memref<1x4x16x8xf32, #tpu.memory_space<vmem>>, vector<1x1x16x8xf32>
    %12 = vector.shape_cast %11 : vector<1x1x16x8xf32> to vector<1x16x8xf32>
    %c2_13 = arith.constant 2 : index
    %c0_14 = arith.constant 0 : index
    %13 = memref.load %arg3[%c2_13, %c0_14] : memref<4x4xf32, #tpu.memory_space<smem>>
    %14 = vector.broadcast %13 : f32 to vector<1x16x8xf32>
    %15 = arith.mulf %12, %14 : vector<1x16x8xf32>
    %16 = arith.addf %10, %15 : vector<1x16x8xf32>
    %c0_15 = arith.constant 0 : index
    %c3 = arith.constant 3 : index
    %c0_16 = arith.constant 0 : index
    %c0_17 = arith.constant 0 : index
    %17 = vector.load %arg2[%c0_15, %c3, %c0_16, %c0_17] : memref<1x4x16x8xf32, #tpu.memory_space<vmem>>, vector<1x1x16x8xf32>
    %18 = vector.shape_cast %17 : vector<1x1x16x8xf32> to vector<1x16x8xf32>
    %c3_18 = arith.constant 3 : index
    %c0_19 = arith.constant 0 : index
    %19 = memref.load %arg3[%c3_18, %c0_19] : memref<4x4xf32, #tpu.memory_space<smem>>
    %20 = vector.broadcast %19 : f32 to vector<1x16x8xf32>
    %21 = arith.mulf %18, %20 : vector<1x16x8xf32>
    %22 = arith.addf %16, %21 : vector<1x16x8xf32>
    %c0_20 = arith.constant 0 : index
    %23 = memref.load %arg4[%c0_20] : memref<4xf32, #tpu.memory_space<smem>>
    %24 = vector.broadcast %23 : f32 to vector<1x16x8xf32>
    %25 = arith.addf %22, %24 : vector<1x16x8xf32>
    %c0_21 = arith.constant 0 : index
    %26 = memref.load %arg4[%c0_21] : memref<4xf32, #tpu.memory_space<smem>>
    %27 = vector.broadcast %26 : f32 to vector<1x16x1x8xf32>
    %28 = vector.shape_cast %25 : vector<1x16x8xf32> to vector<1x16x1x8xf32>
    %29 = tpu.concatenate %28, %27 in 2 : vector<1x16x1x8xf32>, vector<1x16x1x8xf32> -> vector<1x16x2x8xf32>
    %30 = vector.shape_cast %29 : vector<1x16x2x8xf32> to vector<1x32x8xf32>
    %c0_22 = arith.constant 0 : index
    %c0_23 = arith.constant 0 : index
    %c0_24 = arith.constant 0 : index
    %c0_25 = arith.constant 0 : index
    %31 = vector.load %arg5[%c0_22, %c0_23, %c0_24, %c0_25] : memref<1x4x32x8xf32, #tpu.memory_space<vmem>>, vector<1x1x32x8xf32>
    %32 = vector.shape_cast %31 : vector<1x1x32x8xf32> to vector<1x32x8xf32>
    %33 = vector.shape_cast %30 : vector<1x32x8xf32> to vector<1x1x32x8xf32>
    tpu.vector_store %arg5[%c0_22, %c0_23, %c0_24, %c0_25], %33 {strides = array<i32>} : memref<1x4x32x8xf32, #tpu.memory_space<vmem>>, vector<1x1x32x8xf32>,
    %c0_26 = arith.constant 0 : index
    %c0_27 = arith.constant 0 : index
    %c0_28 = arith.constant 0 : index
    %c0_29 = arith.constant 0 : index
    %34 = vector.load %arg2[%c0_26, %c0_27, %c0_28, %c0_29] : memref<1x4x16x8xf32, #tpu.memory_space<vmem>>, vector<1x1x16x8xf32>
    %35 = vector.shape_cast %34 : vector<1x1x16x8xf32> to vector<1x16x8xf32>
    %c0_30 = arith.constant 0 : index
    %c1_31 = arith.constant 1 : index
    %36 = memref.load %arg3[%c0_30, %c1_31] : memref<4x4xf32, #tpu.memory_space<smem>>
    %37 = vector.broadcast %36 : f32 to vector<1x16x8xf32>
    %38 = arith.mulf %35, %37 : vector<1x16x8xf32>
    %c0_32 = arith.constant 0 : index
    %c1_33 = arith.constant 1 : index
    %c0_34 = arith.constant 0 : index
    %c0_35 = arith.constant 0 : index
    %39 = vector.load %arg2[%c0_32, %c1_33, %c0_34, %c0_35] : memref<1x4x16x8xf32, #tpu.memory_space<vmem>>, vector<1x1x16x8xf32>
    %40 = vector.shape_cast %39 : vector<1x1x16x8xf32> to vector<1x16x8xf32>
    %c1_36 = arith.constant 1 : index
    %c1_37 = arith.constant 1 : index
    %41 = memref.load %arg3[%c1_36, %c1_37] : memref<4x4xf32, #tpu.memory_space<smem>>
    %42 = vector.broadcast %41 : f32 to vector<1x16x8xf32>
    %43 = arith.mulf %40, %42 : vector<1x16x8xf32>
    %44 = arith.addf %38, %43 : vector<1x16x8xf32>
    %c0_38 = arith.constant 0 : index
    %c2_39 = arith.constant 2 : index
    %c0_40 = arith.constant 0 : index
    %c0_41 = arith.constant 0 : index
    %45 = vector.load %arg2[%c0_38, %c2_39, %c0_40, %c0_41] : memref<1x4x16x8xf32, #tpu.memory_space<vmem>>, vector<1x1x16x8xf32>
    %46 = vector.shape_cast %45 : vector<1x1x16x8xf32> to vector<1x16x8xf32>
    %c2_42 = arith.constant 2 : index
    %c1_43 = arith.constant 1 : index
    %47 = memref.load %arg3[%c2_42, %c1_43] : memref<4x4xf32, #tpu.memory_space<smem>>
    %48 = vector.broadcast %47 : f32 to vector<1x16x8xf32>
    %49 = arith.mulf %46, %48 : vector<1x16x8xf32>
    %50 = arith.addf %44, %49 : vector<1x16x8xf32>
    %c0_44 = arith.constant 0 : index
    %c3_45 = arith.constant 3 : index
    %c0_46 = arith.constant 0 : index
    %c0_47 = arith.constant 0 : index
    %51 = vector.load %arg2[%c0_44, %c3_45, %c0_46, %c0_47] : memref<1x4x16x8xf32, #tpu.memory_space<vmem>>, vector<1x1x16x8xf32>
    %52 = vector.shape_cast %51 : vector<1x1x16x8xf32> to vector<1x16x8xf32>
    %c3_48 = arith.constant 3 : index
    %c1_49 = arith.constant 1 : index
    %53 = memref.load %arg3[%c3_48, %c1_49] : memref<4x4xf32, #tpu.memory_space<smem>>
    %54 = vector.broadcast %53 : f32 to vector<1x16x8xf32>
    %55 = arith.mulf %52, %54 : vector<1x16x8xf32>
    %56 = arith.addf %50, %55 : vector<1x16x8xf32>
    %c1_50 = arith.constant 1 : index
    %57 = memref.load %arg4[%c1_50] : memref<4xf32, #tpu.memory_space<smem>>
    %58 = vector.broadcast %57 : f32 to vector<1x16x8xf32>
    %59 = arith.addf %56, %58 : vector<1x16x8xf32>
    %c1_51 = arith.constant 1 : index
    %60 = memref.load %arg4[%c1_51] : memref<4xf32, #tpu.memory_space<smem>>
    %61 = vector.broadcast %60 : f32 to vector<1x16x1x8xf32>
    %62 = vector.shape_cast %59 : vector<1x16x8xf32> to vector<1x16x1x8xf32>
    %63 = tpu.concatenate %62, %61 in 2 : vector<1x16x1x8xf32>, vector<1x16x1x8xf32> -> vector<1x16x2x8xf32>
    %64 = vector.shape_cast %63 : vector<1x16x2x8xf32> to vector<1x32x8xf32>
    %c0_52 = arith.constant 0 : index
    %c1_53 = arith.constant 1 : index
    %c0_54 = arith.constant 0 : index
    %c0_55 = arith.constant 0 : index
    %65 = vector.load %arg5[%c0_52, %c1_53, %c0_54, %c0_55] : memref<1x4x32x8xf32, #tpu.memory_space<vmem>>, vector<1x1x32x8xf32>
    %66 = vector.shape_cast %65 : vector<1x1x32x8xf32> to vector<1x32x8xf32>
    %67 = vector.shape_cast %64 : vector<1x32x8xf32> to vector<1x1x32x8xf32>
    tpu.vector_store %arg5[%c0_52, %c1_53, %c0_54, %c0_55], %67 {strides = array<i32>} : memref<1x4x32x8xf32, #tpu.memory_space<vmem>>, vector<1x1x32x8xf32>,
    %c0_56 = arith.constant 0 : index
    %c0_57 = arith.constant 0 : index
    %c0_58 = arith.constant 0 : index
    %c0_59 = arith.constant 0 : index
    %68 = vector.load %arg2[%c0_56, %c0_57, %c0_58, %c0_59] : memref<1x4x16x8xf32, #tpu.memory_space<vmem>>, vector<1x1x16x8xf32>
    %69 = vector.shape_cast %68 : vector<1x1x16x8xf32> to vector<1x16x8xf32>
    %c0_60 = arith.constant 0 : index
    %c2_61 = arith.constant 2 : index
    %70 = memref.load %arg3[%c0_60, %c2_61] : memref<4x4xf32, #tpu.memory_space<smem>>
    %71 = vector.broadcast %70 : f32 to vector<1x16x8xf32>
    %72 = arith.mulf %69, %71 : vector<1x16x8xf32>
    %c0_62 = arith.constant 0 : index
    %c1_63 = arith.constant 1 : index
    %c0_64 = arith.constant 0 : index
    %c0_65 = arith.constant 0 : index
    %73 = vector.load %arg2[%c0_62, %c1_63, %c0_64, %c0_65] : memref<1x4x16x8xf32, #tpu.memory_space<vmem>>, vector<1x1x16x8xf32>
    %74 = vector.shape_cast %73 : vector<1x1x16x8xf32> to vector<1x16x8xf32>
    %c1_66 = arith.constant 1 : index
    %c2_67 = arith.constant 2 : index
    %75 = memref.load %arg3[%c1_66, %c2_67] : memref<4x4xf32, #tpu.memory_space<smem>>
    %76 = vector.broadcast %75 : f32 to vector<1x16x8xf32>
    %77 = arith.mulf %74, %76 : vector<1x16x8xf32>
    %78 = arith.addf %72, %77 : vector<1x16x8xf32>
    %c0_68 = arith.constant 0 : index
    %c2_69 = arith.constant 2 : index
    %c0_70 = arith.constant 0 : index
    %c0_71 = arith.constant 0 : index
    %79 = vector.load %arg2[%c0_68, %c2_69, %c0_70, %c0_71] : memref<1x4x16x8xf32, #tpu.memory_space<vmem>>, vector<1x1x16x8xf32>
    %80 = vector.shape_cast %79 : vector<1x1x16x8xf32> to vector<1x16x8xf32>
    %c2_72 = arith.constant 2 : index
    %c2_73 = arith.constant 2 : index
    %81 = memref.load %arg3[%c2_72, %c2_73] : memref<4x4xf32, #tpu.memory_space<smem>>
    %82 = vector.broadcast %81 : f32 to vector<1x16x8xf32>
    %83 = arith.mulf %80, %82 : vector<1x16x8xf32>
    %84 = arith.addf %78, %83 : vector<1x16x8xf32>
    %c0_74 = arith.constant 0 : index
    %c3_75 = arith.constant 3 : index
    %c0_76 = arith.constant 0 : index
    %c0_77 = arith.constant 0 : index
    %85 = vector.load %arg2[%c0_74, %c3_75, %c0_76, %c0_77] : memref<1x4x16x8xf32, #tpu.memory_space<vmem>>, vector<1x1x16x8xf32>
    %86 = vector.shape_cast %85 : vector<1x1x16x8xf32> to vector<1x16x8xf32>
    %c3_78 = arith.constant 3 : index
    %c2_79 = arith.constant 2 : index
    %87 = memref.load %arg3[%c3_78, %c2_79] : memref<4x4xf32, #tpu.memory_space<smem>>
    %88 = vector.broadcast %87 : f32 to vector<1x16x8xf32>
    %89 = arith.mulf %86, %88 : vector<1x16x8xf32>
    %90 = arith.addf %84, %89 : vector<1x16x8xf32>
    %c2_80 = arith.constant 2 : index
    %91 = memref.load %arg4[%c2_80] : memref<4xf32, #tpu.memory_space<smem>>
    %92 = vector.broadcast %91 : f32 to vector<1x16x8xf32>
    %93 = arith.addf %90, %92 : vector<1x16x8xf32>
    %c2_81 = arith.constant 2 : index
    %94 = memref.load %arg4[%c2_81] : memref<4xf32, #tpu.memory_space<smem>>
    %95 = vector.broadcast %94 : f32 to vector<1x16x1x8xf32>
    %96 = vector.shape_cast %93 : vector<1x16x8xf32> to vector<1x16x1x8xf32>
    %97 = tpu.concatenate %96, %95 in 2 : vector<1x16x1x8xf32>, vector<1x16x1x8xf32> -> vector<1x16x2x8xf32>
    %98 = vector.shape_cast %97 : vector<1x16x2x8xf32> to vector<1x32x8xf32>
    %c0_82 = arith.constant 0 : index
    %c2_83 = arith.constant 2 : index
    %c0_84 = arith.constant 0 : index
    %c0_85 = arith.constant 0 : index
    %99 = vector.load %arg5[%c0_82, %c2_83, %c0_84, %c0_85] : memref<1x4x32x8xf32, #tpu.memory_space<vmem>>, vector<1x1x32x8xf32>
    %100 = vector.shape_cast %99 : vector<1x1x32x8xf32> to vector<1x32x8xf32>
    %101 = vector.shape_cast %98 : vector<1x32x8xf32> to vector<1x1x32x8xf32>
    tpu.vector_store %arg5[%c0_82, %c2_83, %c0_84, %c0_85], %101 {strides = array<i32>} : memref<1x4x32x8xf32, #tpu.memory_space<vmem>>, vector<1x1x32x8xf32>,
    %c0_86 = arith.constant 0 : index
    %c0_87 = arith.constant 0 : index
    %c0_88 = arith.constant 0 : index
    %c0_89 = arith.constant 0 : index
    %102 = vector.load %arg2[%c0_86, %c0_87, %c0_88, %c0_89] : memref<1x4x16x8xf32, #tpu.memory_space<vmem>>, vector<1x1x16x8xf32>
    %103 = vector.shape_cast %102 : vector<1x1x16x8xf32> to vector<1x16x8xf32>
    %c0_90 = arith.constant 0 : index
    %c3_91 = arith.constant 3 : index
    %104 = memref.load %arg3[%c0_90, %c3_91] : memref<4x4xf32, #tpu.memory_space<smem>>
    %105 = vector.broadcast %104 : f32 to vector<1x16x8xf32>
    %106 = arith.mulf %103, %105 : vector<1x16x8xf32>
    %c0_92 = arith.constant 0 : index
    %c1_93 = arith.constant 1 : index
    %c0_94 = arith.constant 0 : index
    %c0_95 = arith.constant 0 : index
    %107 = vector.load %arg2[%c0_92, %c1_93, %c0_94, %c0_95] : memref<1x4x16x8xf32, #tpu.memory_space<vmem>>, vector<1x1x16x8xf32>
    %108 = vector.shape_cast %107 : vector<1x1x16x8xf32> to vector<1x16x8xf32>
    %c1_96 = arith.constant 1 : index
    %c3_97 = arith.constant 3 : index
    %109 = memref.load %arg3[%c1_96, %c3_97] : memref<4x4xf32, #tpu.memory_space<smem>>
    %110 = vector.broadcast %109 : f32 to vector<1x16x8xf32>
    %111 = arith.mulf %108, %110 : vector<1x16x8xf32>
    %112 = arith.addf %106, %111 : vector<1x16x8xf32>
    %c0_98 = arith.constant 0 : index
    %c2_99 = arith.constant 2 : index
    %c0_100 = arith.constant 0 : index
    %c0_101 = arith.constant 0 : index
    %113 = vector.load %arg2[%c0_98, %c2_99, %c0_100, %c0_101] : memref<1x4x16x8xf32, #tpu.memory_space<vmem>>, vector<1x1x16x8xf32>
    %114 = vector.shape_cast %113 : vector<1x1x16x8xf32> to vector<1x16x8xf32>
    %c2_102 = arith.constant 2 : index
    %c3_103 = arith.constant 3 : index
    %115 = memref.load %arg3[%c2_102, %c3_103] : memref<4x4xf32, #tpu.memory_space<smem>>
    %116 = vector.broadcast %115 : f32 to vector<1x16x8xf32>
    %117 = arith.mulf %114, %116 : vector<1x16x8xf32>
    %118 = arith.addf %112, %117 : vector<1x16x8xf32>
    %c0_104 = arith.constant 0 : index
    %c3_105 = arith.constant 3 : index
    %c0_106 = arith.constant 0 : index
    %c0_107 = arith.constant 0 : index
    %119 = vector.load %arg2[%c0_104, %c3_105, %c0_106, %c0_107] : memref<1x4x16x8xf32, #tpu.memory_space<vmem>>, vector<1x1x16x8xf32>
    %120 = vector.shape_cast %119 : vector<1x1x16x8xf32> to vector<1x16x8xf32>
    %c3_108 = arith.constant 3 : index
    %c3_109 = arith.constant 3 : index
    %121 = memref.load %arg3[%c3_108, %c3_109] : memref<4x4xf32, #tpu.memory_space<smem>>
    %122 = vector.broadcast %121 : f32 to vector<1x16x8xf32>
    %123 = arith.mulf %120, %122 : vector<1x16x8xf32>
    %124 = arith.addf %118, %123 : vector<1x16x8xf32>
    %c3_110 = arith.constant 3 : index
    %125 = memref.load %arg4[%c3_110] : memref<4xf32, #tpu.memory_space<smem>>
    %126 = vector.broadcast %125 : f32 to vector<1x16x8xf32>
    %127 = arith.addf %124, %126 : vector<1x16x8xf32>
    %c3_111 = arith.constant 3 : index
    %128 = memref.load %arg4[%c3_111] : memref<4xf32, #tpu.memory_space<smem>>
    %129 = vector.broadcast %128 : f32 to vector<1x16x1x8xf32>
    %130 = vector.shape_cast %127 : vector<1x16x8xf32> to vector<1x16x1x8xf32>
    %131 = tpu.concatenate %130, %129 in 2 : vector<1x16x1x8xf32>, vector<1x16x1x8xf32> -> vector<1x16x2x8xf32>
    %132 = vector.shape_cast %131 : vector<1x16x2x8xf32> to vector<1x32x8xf32>
    %c0_112 = arith.constant 0 : index
    %c3_113 = arith.constant 3 : index
    %c0_114 = arith.constant 0 : index
    %c0_115 = arith.constant 0 : index
    %133 = vector.load %arg5[%c0_112, %c3_113, %c0_114, %c0_115] : memref<1x4x32x8xf32, #tpu.memory_space<vmem>>, vector<1x1x32x8xf32>
    %134 = vector.shape_cast %133 : vector<1x1x32x8xf32> to vector<1x32x8xf32>
    %135 = vector.shape_cast %132 : vector<1x32x8xf32> to vector<1x1x32x8xf32>
    tpu.vector_store %arg5[%c0_112, %c3_113, %c0_114, %c0_115], %135 {strides = array<i32>} : memref<1x4x32x8xf32, #tpu.memory_space<vmem>>, vector<1x1x32x8xf32>,
    return
  }
  func.func @transform_0(%arg0: i32, %arg1: i32) -> (i32, i32, i32, i32) {
    %c0_i32 = arith.constant 0 : i32
    %c0_i32_0 = arith.constant 0 : i32
    %c0_i32_1 = arith.constant 0 : i32
    return %arg0, %c0_i32, %c0_i32_0, %arg1 : i32, i32, i32, i32
  }
  func.func @transform_1(%arg0: i32, %arg1: i32) -> (i32, i32) {
    %c0_i32 = arith.constant 0 : i32
    %c0_i32_0 = arith.constant 0 : i32
    %c0_i32_1 = arith.constant 0 : i32
    return %c0_i32, %c0_i32_0 : i32, i32
  }
  func.func @transform_2(%arg0: i32, %arg1: i32) -> i32 {
    %c0_i32 = arith.constant 0 : i32
    %c0_i32_0 = arith.constant 0 : i32
    return %c0_i32 : i32
  }
  func.func @transform_3(%arg0: i32, %arg1: i32) -> (i32, i32, i32, i32) {
    %c0_i32 = arith.constant 0 : i32
    %c0_i32_0 = arith.constant 0 : i32
    %c0_i32_1 = arith.constant 0 : i32
    return %arg0, %c0_i32, %c0_i32_0, %arg1 : i32, i32, i32, i32
  }
}

</mosaic_0001>

<llo_original>
// kernel: tpu_custom_call.1
$region0: #{tpu_custom_call.1}
  #allocation0 [shape = 'u32[]', space=smem, size = 0x4, offset = 0x4, fixed_abs, tag = 'smem constant byte address 0x4 - core index']
  #allocation1 [shape = 'u32[144,128]{1,0:T(1,128)}', space=vmem, size = 0x12000, scoped, tag = 'internal scratch']
  %s0 = inlined_call_operand.vmem [shape: f32[2,4,16,8], index: 0, kind: input, shape index: {}]
  %s1 = inlined_call_operand.vmem [shape: f32[4,4], index: 1, kind: input, shape index: {}]
  %s2 = inlined_call_operand.vmem [shape: f32[4], index: 2, kind: input, shape index: {}]
  %s3 = inlined_call_operand.vmem [shape: f32[2,4,32,8], index: 3, kind: output, shape index: {}]
  %s4 = sld [smem:[#allocation0]]
  $region53: #{tpu_custom_call.1} parent=0
    _
  %s6 = ssub.s32 1, %s4
  %s7 = scalar_select 0, %s6, %s4
  $region1: #{tpu_custom_call.1} parent=0
    #allocation2 [shape = 'u8[2048]{0}', space=smem, size = 0x800, scoped, tag = 'input window, operand 1, single buffered']
    #allocation3 [shape = 's32[2]{0}', space=sflag, size = 0x8, scoped, tag = 'scoped memory for tpu_custom_call.1']
    #allocation4 [shape = 'u8[512]{0}', space=smem, size = 0x200, scoped, tag = 'input window, operand 2, single buffered']
    #allocation5 [shape = 's32[1]{0}', space=sflag, size = 0x4, scoped, tag = 'scoped memory for tpu_custom_call.1']
    %8 = vsyncpa [#allocation3], 0
    %9 = vsyncpa [#allocation5], 0
    loop: start=0, step=1, limit=4
    $region2: #{tpu_custom_call.1} parent=1 // loop_pre_header
      _
    $region3: #{tpu_custom_call.1} parent=1 // loop_header
      %s11 = sphi 0, %s15
      %p12 = scmp.ge.s32.totalorder %s11, 4
      %s18 = sphi 0, %s30
      %s19 = sphi 0, %s26
      %s20 = sphi 0, %s18
      %s21 = sphi 0, %s19
      %s22 = sphi 0, %s20
      %s23 = sphi 0, %s21
      %s35 = sphi 0, %s37
      %s38 = sphi 0, %s35
      %s39 = sphi 0, %s38
      %s55 = sphi 0, %s39
      %s59 = sphi 0, %s59
      %s61 = sphi 0, %s59
      %s62 = sphi 0, %s61
      %s76 = sphi 0, %s62
      %s80 = sphi 0, %s80
      %s82 = sphi 0, %s80
      %s83 = sphi 0, %s82
      %s97 = sphi 0, %s83
      %s105 = sphi 0, %s107
      %s108 = sphi 0, %s105
      %s109 = sphi 0, %s108
      %s125 = sphi 0, %s109
    $region4: #{tpu_custom_call.1} parent=1 // loop_header_branch
      %14 = sbr.rel (%p12) target = $region8
    $region5: #{tpu_custom_call.1} parent=1 // loop_body
      %s16 = ssub.s32 %s11, 1
      %s17 = ssub.s32 %s11, 2
      %s24 = sadd.s32 1, %s19
      %p25 = scmp.ge.s32.totalorder %s24, 1
      %s26 = scalar_select %p25, 0, %s24
      %s27 = sadd.s32 1, %s18
      %s28 = scalar_select %p25, %s27, %s18
      %p29 = scmp.ge.s32.totalorder %s28, 2
      %s30 = scalar_select %p29, 0, %s28
      %s31 = ssub.s32 %s18, %s30
      %s32 = ssub.s32 %s19, %s26
      %s33 = sor.u32 %s31, %s32
      %p34 = scmp.eq.s32.totalorder %s33, 0
      %s36 = sadd.s32 %s35, 1
      %s37 = scalar_select %p34, %s35, %s36
      %p40 = pneg %p34
      %p41 = scmp.eq.s32.totalorder %s11, 1
      %p42 = por %p40, %p41
      %p43 = scmp.ne.s32.totalorder %s35, %s38
      %p44 = scmp.eq.s32.totalorder %s11, 0
      %p45 = por %p43, %p44
      %p46 = scmp.ne.s32.totalorder %s35, %s38
      %p47 = scmp.eq.s32.totalorder %s16, 1
      %p48 = por %p46, %p47
      %p49 = scmp.ne.s32.totalorder %s38, %s39
      %p50 = scmp.eq.s32.totalorder %s16, 0
      %p51 = por %p49, %p50
      %p52 = scmp.ne.s32.totalorder %s38, %s39
      %p53 = scmp.eq.s32.totalorder %s17, 1
      %p54 = por %p52, %p53
      %p56 = scmp.ne.s32.totalorder %s39, %s55
      %p57 = scmp.eq.s32.totalorder %s17, 0
      %p58 = por %p56, %p57
      %s60 = sadd.s32 %s59, 1
      %p63 = scmp.eq.s32.totalorder %s11, 1
      %p64 = scmp.ne.s32.totalorder %s59, %s61
      %p65 = scmp.eq.s32.totalorder %s11, 0
      %p66 = por %p64, %p65
      %p67 = scmp.ne.s32.totalorder %s59, %s61
      %p68 = scmp.eq.s32.totalorder %s16, 1
      %p69 = por %p67, %p68
      %p70 = scmp.ne.s32.totalorder %s61, %s62
      %p71 = scmp.eq.s32.totalorder %s16, 0
      %p72 = por %p70, %p71
      %p73 = scmp.ne.s32.totalorder %s61, %s62
      %p74 = scmp.eq.s32.totalorder %s17, 1
      %p75 = por %p73, %p74
      %p77 = scmp.ne.s32.totalorder %s62, %s76
      %p78 = scmp.eq.s32.totalorder %s17, 0
      %p79 = por %p77, %p78
      %s81 = sadd.s32 %s80, 1
      %p84 = scmp.eq.s32.totalorder %s11, 1
      %p85 = scmp.ne.s32.totalorder %s80, %s82
      %p86 = scmp.eq.s32.totalorder %s11, 0
      %p87 = por %p85, %p86
      %p88 = scmp.ne.s32.totalorder %s80, %s82
      %p89 = scmp.eq.s32.totalorder %s16, 1
      %p90 = por %p88, %p89
      %p91 = scmp.ne.s32.totalorder %s82, %s83
      %p92 = scmp.eq.s32.totalorder %s16, 0
      %p93 = por %p91, %p92
      %p94 = scmp.ne.s32.totalorder %s82, %s83
      %p95 = scmp.eq.s32.totalorder %s17, 1
      %p96 = por %p94, %p95
      %p98 = scmp.ne.s32.totalorder %s83, %s97
      %p99 = scmp.eq.s32.totalorder %s17, 0
      %p100 = por %p98, %p99
      %s101 = ssub.s32 %s18, %s30
      %s102 = ssub.s32 %s19, %s26
      %s103 = sor.u32 %s101, %s102
      %p104 = scmp.eq.s32.totalorder %s103, 0
      %s106 = sadd.s32 %s105, 1
      %s107 = scalar_select %p104, %s105, %s106
      %p110 = pneg %p104
      %p111 = scmp.eq.s32.totalorder %s11, 1
      %p112 = por %p110, %p111
      %p113 = scmp.ne.s32.totalorder %s105, %s108
      %p114 = scmp.eq.s32.totalorder %s11, 0
      %p115 = por %p113, %p114
      %p116 = scmp.ne.s32.totalorder %s105, %s108
      %p117 = scmp.eq.s32.totalorder %s16, 1
      %p118 = por %p116, %p117
      %p119 = scmp.ne.s32.totalorder %s108, %s109
      %p120 = scmp.eq.s32.totalorder %s16, 0
      %p121 = por %p119, %p120
      %p122 = scmp.ne.s32.totalorder %s108, %s109
      %p123 = scmp.eq.s32.totalorder %s17, 1
      %p124 = por %p122, %p123
      %p126 = scmp.ne.s32.totalorder %s109, %s125
      %p127 = scmp.eq.s32.totalorder %s17, 0
      %p128 = por %p126, %p127
      %p129 = scmp.le.s32.totalorder 1, %s11
      %p130 = scmp.lt.s32.totalorder %s11, 3
      %p131 = pnand %p129, %p130
      %p132 = pneg %p131
      // Predicated region
      $region9: #{tpu_custom_call.1} parent=5 // pred_check
        _
      $region10: #{tpu_custom_call.1} parent=5 // pred_check_branch
        %134 = sbr.rel (%p131) target = $region12
      $region11: #{tpu_custom_call.1} parent=5 // pred_region
        %s135 = ssub.s32 %s11, 1
        // Predicated region
        $region13: #{tpu_custom_call.1} parent=11 // pred_check
          %p136 = pneg %p72
        $region14: #{tpu_custom_call.1} parent=11 // pred_check_branch
          %138 = sbr.rel (%p136) target = $region16
        $region15: #{tpu_custom_call.1} parent=11 // pred_region
          %s140 = ssub.s32 64, 64
          %141 = vsyncadd [#allocation3], %s140
          %s143 = sshll.u32 %s1, 4
          %s144 = int_to_ptr.vmem [resolvable:$true] %s143
          %146 = dma.vmem_to_smem %s144, 64, [#allocation2], [#allocation3]
        $region16: #{tpu_custom_call.1} parent=11 // pred_fallthru
          _
        // Predicated region
        $region17: #{tpu_custom_call.1} parent=11 // pred_check
          %p147 = pneg %p93
        $region18: #{tpu_custom_call.1} parent=11 // pred_check_branch
          %149 = sbr.rel (%p147) target = $region20
        $region19: #{tpu_custom_call.1} parent=11 // pred_region
          %s151 = ssub.s32 16, 16
          %152 = vsyncadd [#allocation5], %s151
          %s154 = sshll.u32 %s2, 4
          %s155 = int_to_ptr.vmem [resolvable:$true] %s154
          %157 = dma.vmem_to_smem %s155, 16, [#allocation4], [#allocation5]
        $region20: #{tpu_custom_call.1} parent=11 // pred_fallthru
          _
      $region12: #{tpu_custom_call.1} parent=5 // pred_fallthru
        _
      %p158 = scmp.lt.s32.totalorder %s11, 2
      // Predicated region
      $region21: #{tpu_custom_call.1} parent=5 // pred_check
        %p159 = pneg %p158
      $region22: #{tpu_custom_call.1} parent=5 // pred_check_branch
        %161 = sbr.rel (%p159) target = $region24
      $region23: #{tpu_custom_call.1} parent=5 // pred_region
        // Predicated region
        $region25: #{tpu_custom_call.1} parent=23 // pred_check
          %p162 = pneg %p45
        $region26: #{tpu_custom_call.1} parent=23 // pred_check_branch
          %164 = sbr.rel (%p162) target = $region28
        $region27: #{tpu_custom_call.1} parent=23 // pred_region
          %p165 = scmp.lt.s32.totalorder %s18, 1
          %s166 = scalar_select %p165, %s18, 1
          %p167 = scmp.lt.s32.totalorder %s19, 0
          %s168 = scalar_select %p167, %s19, 0
          %s169 = smul.addr %s166, 8
          %s170 = sadd.s32 %s168, %s169
          %s171 = smul.addr %s170, 8
          %s172 = scalar_lea.vmem %s0, %s171
        $region28: #{tpu_custom_call.1} parent=23 // pred_fallthru
          _
      $region24: #{tpu_custom_call.1} parent=5 // pred_fallthru
        _
      %p173 = scmp.le.s32.totalorder 1, %s11
      %p174 = scmp.lt.s32.totalorder %s11, 3
      %p175 = pnand %p173, %p174
      %p176 = pneg %p175
      // Predicated region
      $region29: #{tpu_custom_call.1} parent=5 // pred_check
        _
      $region30: #{tpu_custom_call.1} parent=5 // pred_check_branch
        %178 = sbr.rel (%p175) target = $region32
      $region31: #{tpu_custom_call.1} parent=5 // pred_region
        %s179 = ssub.s32 %s11, 1
        // Predicated region
        $region33: #{tpu_custom_call.1} parent=31 // pred_check
          %p180 = pneg %p72
        $region34: #{tpu_custom_call.1} parent=31 // pred_check_branch
          %182 = sbr.rel (%p180) target = $region36
        $region35: #{tpu_custom_call.1} parent=31 // pred_region
          %183 = dma.done [#allocation3], 64
        $region36: #{tpu_custom_call.1} parent=31 // pred_fallthru
          _
        // Predicated region
        $region37: #{tpu_custom_call.1} parent=31 // pred_check
          %p184 = pneg %p93
        $region38: #{tpu_custom_call.1} parent=31 // pred_check_branch
          %186 = sbr.rel (%p184) target = $region40
        $region39: #{tpu_custom_call.1} parent=31 // pred_region
          %187 = dma.done [#allocation5], 16
        $region40: #{tpu_custom_call.1} parent=31 // pred_fallthru
          _
        %188 = sfence
        %p189 = scmp.lt.s32.totalorder %s20, 1
        %s190 = scalar_select %p189, %s20, 1
        %p191 = scmp.lt.s32.totalorder %s21, 0
        %s192 = scalar_select %p191, %s21, 0
        %s193 = smul.addr %s190, 8
        %s194 = sadd.s32 %s192, %s193
        %s195 = smul.addr %s194, 8
        %s196 = scalar_lea.vmem %s0, %s195
        %p197 = pneg %p51
        %p198 = pneg %p48
        %p199 = pneg %p72
        %p200 = pneg %p69
        %p201 = pneg %p93
        %p202 = pneg %p90
        %p203 = pneg %p121
        %p204 = pneg %p118
        %p205 = scmp.lt.s32.totalorder %s20, 1
        %s206 = scalar_select %p205, %s20, 1
        %p207 = scmp.lt.s32.totalorder %s21, 0
        %s208 = scalar_select %p207, %s21, 0
        %s209 = smul.addr %s206, 16
        %s210 = sadd.s32 %s208, %s209
        %s211 = smul.addr %s210, 8
        %s212 = scalar_lea.vmem %s3, %s211
        %p213 = scmp.lt.s32.totalorder %s20, 1
        %s214 = scalar_select %p213, %s20, 1
        %p215 = scmp.lt.s32.totalorder %s21, 0
        %s216 = scalar_select %p215, %s21, 0
        %s217 = smul.addr %s214, 8
        %s218 = sadd.s32 %s216, %s217
        %s219 = smul.addr %s218, 8
        %s220 = scalar_lea.vmem %s0, %s219
        %p221 = scmp.lt.s32.totalorder %s20, 1
        %s222 = scalar_select %p221, %s20, 1
        %p223 = scmp.lt.s32.totalorder %s21, 0
        %s224 = scalar_select %p223, %s21, 0
        %s225 = smul.addr %s222, 16
        %s226 = sadd.s32 %s224, %s225
        %s227 = smul.addr %s226, 8
        %s228 = scalar_lea.vmem %s3, %s227
        %v229 = vld [vmem:[%s220] sm:$0xff]
        %v230 = vld [vmem:[%s220 + $0x8] sm:$0xff]
        %s231 = sld [smem:[#allocation2]]
        %v232 = vstv %s231
        %v233 = vmul.f32 %v229, %v232
        %v234 = vmul.f32 %v230, %v232
        %s235 = scalar_lea.vmem %s220, 16
        %v236 = vld [vmem:[%s235] sm:$0xff]
        %v237 = vld [vmem:[%s235 + $0x8] sm:$0xff]
        %s238 = sld [smem:[#allocation2 + $0x80]]
        %v239 = vstv %s238
        %v240 = vmul.f32 %v236, %v239
        %v241 = vmul.f32 %v237, %v239
        %v242 = vadd.f32 %v233, %v240
        %v243 = vadd.f32 %v234, %v241
        %s244 = scalar_lea.vmem %s220, 32
        %v245 = vld [vmem:[%s244] sm:$0xff]
        %v246 = vld [vmem:[%s244 + $0x8] sm:$0xff]
        %s247 = sld [smem:[#allocation2 + $0x100]]
        %v248 = vstv %s247
        %v249 = vmul.f32 %v245, %v248
        %v250 = vmul.f32 %v246, %v248
        %v251 = vadd.f32 %v242, %v249
        %v252 = vadd.f32 %v243, %v250
        %s253 = scalar_lea.vmem %s220, 48
        %v254 = vld [vmem:[%s253] sm:$0xff]
        %v255 = vld [vmem:[%s253 + $0x8] sm:$0xff]
        %s256 = sld [smem:[#allocation2 + $0x180]]
        %v257 = vstv %s256
        %v258 = vmul.f32 %v254, %v257
        %v259 = vmul.f32 %v255, %v257
        %v260 = vadd.f32 %v251, %v258
        %v261 = vadd.f32 %v252, %v259
        %s262 = sld [smem:[#allocation4]]
        %v263 = vstv %s262
        %v264 = vadd.f32 %v260, %v263
        %v265 = vadd.f32 %v261, %v263
        %v268 = vcombine.high %v264, %v264
        %v270 = vunpack.c.l.s4 1966171168
        %v271 = vunpack.c.0.s8 %v270
        %v272 = vlaneseq
        %v273 = vshrl.u32 %v272, 7
        %v274 = vsub.s32 %v271, %v273
        %v275 = vrot.slane %v264, %v274
        %v277 = vunpack.c.l.s4 1966171168
        %v278 = vunpack.c.0.s8 %v277
        %v279 = vlaneseq
        %v280 = vshrl.u32 %v279, 7
        %v281 = vsub.s32 %v278, %v280
        %v282 = vrot.slane %v268, %v281
        %v283 = vcombine.high %v275, %v275
        %v284 = vcombine.high %v282, %v282
        %v286 = vunpack.c.l.s4 1966171168
        %v287 = vunpack.c.0.s8 %v286
        %v288 = vlaneseq
        %v289 = vshrl.u32 %v288, 7
        %v290 = vsub.s32 %v287, %v289
        %v291 = vrot.slane %v275, %v290
        %v293 = vunpack.c.l.s4 1966171168
        %v294 = vunpack.c.0.s8 %v293
        %v295 = vlaneseq
        %v296 = vshrl.u32 %v295, 7
        %v297 = vsub.s32 %v294, %v296
        %v298 = vrot.slane %v282, %v297
        %v300 = vunpack.c.l.s4 1966171168
        %v301 = vunpack.c.0.s8 %v300
        %v302 = vlaneseq
        %v303 = vshrl.u32 %v302, 7
        %v304 = vsub.s32 %v301, %v303
        %v305 = vrot.slane %v283, %v304
        %v307 = vunpack.c.l.s4 1966171168
        %v308 = vunpack.c.0.s8 %v307
        %v309 = vlaneseq
        %v310 = vshrl.u32 %v309, 7
        %v311 = vsub.s32 %v308, %v310
        %v312 = vrot.slane %v284, %v311
        %v313 = vcombine.high %v291, %v291
        %v314 = vcombine.high %v298, %v298
        %v315 = vcombine.high %v305, %v305
        %v316 = vcombine.high %v312, %v312
        %v317 = vcombine.high %v265, %v265
        %v319 = vunpack.c.l.s4 1966171168
        %v320 = vunpack.c.0.s8 %v319
        %v321 = vlaneseq
        %v322 = vshrl.u32 %v321, 7
        %v323 = vsub.s32 %v320, %v322
        %v324 = vrot.slane %v265, %v323
        %v326 = vunpack.c.l.s4 1966171168
        %v327 = vunpack.c.0.s8 %v326
        %v328 = vlaneseq
        %v329 = vshrl.u32 %v328, 7
        %v330 = vsub.s32 %v327, %v329
        %v331 = vrot.slane %v317, %v330
        %v332 = vcombine.high %v324, %v324
        %v333 = vcombine.high %v331, %v331
        %v335 = vunpack.c.l.s4 1966171168
        %v336 = vunpack.c.0.s8 %v335
        %v337 = vlaneseq
        %v338 = vshrl.u32 %v337, 7
        %v339 = vsub.s32 %v336, %v338
        %v340 = vrot.slane %v324, %v339
        %v342 = vunpack.c.l.s4 1966171168
        %v343 = vunpack.c.0.s8 %v342
        %v344 = vlaneseq
        %v345 = vshrl.u32 %v344, 7
        %v346 = vsub.s32 %v343, %v345
        %v347 = vrot.slane %v331, %v346
        %v349 = vunpack.c.l.s4 1966171168
        %v350 = vunpack.c.0.s8 %v349
        %v351 = vlaneseq
        %v352 = vshrl.u32 %v351, 7
        %v353 = vsub.s32 %v350, %v352
        %v354 = vrot.slane %v332, %v353
        %v356 = vunpack.c.l.s4 1966171168
        %v357 = vunpack.c.0.s8 %v356
        %v358 = vlaneseq
        %v359 = vshrl.u32 %v358, 7
        %v360 = vsub.s32 %v357, %v359
        %v361 = vrot.slane %v333, %v360
        %v362 = vcombine.high %v340, %v340
        %v363 = vcombine.high %v347, %v347
        %v364 = vcombine.high %v354, %v354
        %v365 = vcombine.high %v361, %v361
        %vm382 = vcmask 1040384
        %v383 = vsel %vm382, %v291, %v263
        %v384 = vsel %vm382, %v305, %v263
        %v385 = vsel %vm382, %v313, %v263
        %v386 = vsel %vm382, %v315, %v263
        %v387 = vsel %vm382, %v298, %v263
        %v388 = vsel %vm382, %v312, %v263
        %v389 = vsel %vm382, %v314, %v263
        %v390 = vsel %vm382, %v316, %v263
        %v391 = vsel %vm382, %v340, %v263
        %v392 = vsel %vm382, %v354, %v263
        %v393 = vsel %vm382, %v362, %v263
        %v394 = vsel %vm382, %v364, %v263
        %v395 = vsel %vm382, %v347, %v263
        %v396 = vsel %vm382, %v361, %v263
        %v397 = vsel %vm382, %v363, %v263
        %v398 = vsel %vm382, %v365, %v263
        %v415 = vcombine.low %v383, %v384
        %v416 = vcombine.low %v385, %v386
        %v418 = vunpack.c.l.s4 1983009808
        %v419 = vunpack.c.0.s8 %v418
        %v420 = vlaneseq
        %v421 = vshrl.u32 %v420, 7
        %v422 = vsub.s32 %v419, %v421
        %v423 = vrot.slane %v415, %v422
        %v425 = vunpack.c.l.s4 1983009808
        %v426 = vunpack.c.0.s8 %v425
        %v427 = vlaneseq
        %v428 = vshrl.u32 %v427, 7
        %v429 = vsub.s32 %v426, %v428
        %v430 = vrot.slane %v416, %v429
        %v431 = vcombine.low %v423, %v430
        %v432 = vcombine.low %v387, %v388
        %v433 = vcombine.low %v389, %v390
        %v435 = vunpack.c.l.s4 1983009808
        %v436 = vunpack.c.0.s8 %v435
        %v437 = vlaneseq
        %v438 = vshrl.u32 %v437, 7
        %v439 = vsub.s32 %v436, %v438
        %v440 = vrot.slane %v432, %v439
        %v442 = vunpack.c.l.s4 1983009808
        %v443 = vunpack.c.0.s8 %v442
        %v444 = vlaneseq
        %v445 = vshrl.u32 %v444, 7
        %v446 = vsub.s32 %v443, %v445
        %v447 = vrot.slane %v433, %v446
        %v448 = vcombine.low %v440, %v447
        %v449 = vcombine.low %v391, %v392
        %v450 = vcombine.low %v393, %v394
        %v452 = vunpack.c.l.s4 1983009808
        %v453 = vunpack.c.0.s8 %v452
        %v454 = vlaneseq
        %v455 = vshrl.u32 %v454, 7
        %v456 = vsub.s32 %v453, %v455
        %v457 = vrot.slane %v449, %v456
        %v459 = vunpack.c.l.s4 1983009808
        %v460 = vunpack.c.0.s8 %v459
        %v461 = vlaneseq
        %v462 = vshrl.u32 %v461, 7
        %v463 = vsub.s32 %v460, %v462
        %v464 = vrot.slane %v450, %v463
        %v465 = vcombine.low %v457, %v464
        %v466 = vcombine.low %v395, %v396
        %v467 = vcombine.low %v397, %v398
        %v469 = vunpack.c.l.s4 1983009808
        %v470 = vunpack.c.0.s8 %v469
        %v471 = vlaneseq
        %v472 = vshrl.u32 %v471, 7
        %v473 = vsub.s32 %v470, %v472
        %v474 = vrot.slane %v466, %v473
        %v476 = vunpack.c.l.s4 1983009808
        %v477 = vunpack.c.0.s8 %v476
        %v478 = vlaneseq
        %v479 = vshrl.u32 %v478, 7
        %v480 = vsub.s32 %v477, %v479
        %v481 = vrot.slane %v467, %v480
        %v482 = vcombine.low %v474, %v481
        %vm487 = vcmask 64512
        %488 = vst.msk [vmem:[%s228] sm:$0xff] %vm487, %v431
        %489 = vst.msk [vmem:[%s228 + $0x8] sm:$0xff] %vm487, %v448
        %490 = vst.msk [vmem:[%s228 + $0x10] sm:$0xff] %vm487, %v465
        %491 = vst.msk [vmem:[%s228 + $0x18] sm:$0xff] %vm487, %v482
        %v492 = vld [vmem:[%s220] sm:$0xff]
        %v493 = vld [vmem:[%s220 + $0x8] sm:$0xff]
        %s494 = sld [smem:[#allocation2 + $0x1]]
        %v495 = vstv %s494
        %v496 = vmul.f32 %v492, %v495
        %v497 = vmul.f32 %v493, %v495
        %v498 = vld [vmem:[%s235] sm:$0xff]
        %v499 = vld [vmem:[%s235 + $0x8] sm:$0xff]
        %s500 = sld [smem:[#allocation2 + $0x81]]
        %v501 = vstv %s500
        %v502 = vmul.f32 %v498, %v501
        %v503 = vmul.f32 %v499, %v501
        %v504 = vadd.f32 %v496, %v502
        %v505 = vadd.f32 %v497, %v503
        %v506 = vld [vmem:[%s244] sm:$0xff]
        %v507 = vld [vmem:[%s244 + $0x8] sm:$0xff]
        %s508 = sld [smem:[#allocation2 + $0x101]]
        %v509 = vstv %s508
        %v510 = vmul.f32 %v506, %v509
        %v511 = vmul.f32 %v507, %v509
        %v512 = vadd.f32 %v504, %v510
        %v513 = vadd.f32 %v505, %v511
        %v514 = vld [vmem:[%s253] sm:$0xff]
        %v515 = vld [vmem:[%s253 + $0x8] sm:$0xff]
        %s516 = sld [smem:[#allocation2 + $0x181]]
        %v517 = vstv %s516
        %v518 = vmul.f32 %v514, %v517
        %v519 = vmul.f32 %v515, %v517
        %v520 = vadd.f32 %v512, %v518
        %v521 = vadd.f32 %v513, %v519
        %s522 = sld [smem:[#allocation4 + $0x1]]
        %v523 = vstv %s522
        %v524 = vadd.f32 %v520, %v523
        %v525 = vadd.f32 %v521, %v523
        %v528 = vcombine.high %v524, %v524
        %v530 = vunpack.c.l.s4 1966171168
        %v531 = vunpack.c.0.s8 %v530
        %v532 = vlaneseq
        %v533 = vshrl.u32 %v532, 7
        %v534 = vsub.s32 %v531, %v533
        %v535 = vrot.slane %v524, %v534
        %v537 = vunpack.c.l.s4 1966171168
        %v538 = vunpack.c.0.s8 %v537
        %v539 = vlaneseq
        %v540 = vshrl.u32 %v539, 7
        %v541 = vsub.s32 %v538, %v540
        %v542 = vrot.slane %v528, %v541
        %v543 = vcombine.high %v535, %v535
        %v544 = vcombine.high %v542, %v542
        %v546 = vunpack.c.l.s4 1966171168
        %v547 = vunpack.c.0.s8 %v546
        %v548 = vlaneseq
        %v549 = vshrl.u32 %v548, 7
        %v550 = vsub.s32 %v547, %v549
        %v551 = vrot.slane %v535, %v550
        %v553 = vunpack.c.l.s4 1966171168
        %v554 = vunpack.c.0.s8 %v553
        %v555 = vlaneseq
        %v556 = vshrl.u32 %v555, 7
        %v557 = vsub.s32 %v554, %v556
        %v558 = vrot.slane %v542, %v557
        %v560 = vunpack.c.l.s4 1966171168
        %v561 = vunpack.c.0.s8 %v560
        %v562 = vlaneseq
        %v563 = vshrl.u32 %v562, 7
        %v564 = vsub.s32 %v561, %v563
        %v565 = vrot.slane %v543, %v564
        %v567 = vunpack.c.l.s4 1966171168
        %v568 = vunpack.c.0.s8 %v567
        %v569 = vlaneseq
        %v570 = vshrl.u32 %v569, 7
        %v571 = vsub.s32 %v568, %v570
        %v572 = vrot.slane %v544, %v571
        %v573 = vcombine.high %v551, %v551
        %v574 = vcombine.high %v558, %v558
        %v575 = vcombine.high %v565, %v565
        %v576 = vcombine.high %v572, %v572
        %v577 = vcombine.high %v525, %v525
        %v579 = vunpack.c.l.s4 1966171168
        %v580 = vunpack.c.0.s8 %v579
        %v581 = vlaneseq
        %v582 = vshrl.u32 %v581, 7
        %v583 = vsub.s32 %v580, %v582
        %v584 = vrot.slane %v525, %v583
        %v586 = vunpack.c.l.s4 1966171168
        %v587 = vunpack.c.0.s8 %v586
        %v588 = vlaneseq
        %v589 = vshrl.u32 %v588, 7
        %v590 = vsub.s32 %v587, %v589
        %v591 = vrot.slane %v577, %v590
        %v592 = vcombine.high %v584, %v584
        %v593 = vcombine.high %v591, %v591
        %v595 = vunpack.c.l.s4 1966171168
        %v596 = vunpack.c.0.s8 %v595
        %v597 = vlaneseq
        %v598 = vshrl.u32 %v597, 7
        %v599 = vsub.s32 %v596, %v598
        %v600 = vrot.slane %v584, %v599
        %v602 = vunpack.c.l.s4 1966171168
        %v603 = vunpack.c.0.s8 %v602
        %v604 = vlaneseq
        %v605 = vshrl.u32 %v604, 7
        %v606 = vsub.s32 %v603, %v605
        %v607 = vrot.slane %v591, %v606
        %v609 = vunpack.c.l.s4 1966171168
        %v610 = vunpack.c.0.s8 %v609
        %v611 = vlaneseq
        %v612 = vshrl.u32 %v611, 7
        %v613 = vsub.s32 %v610, %v612
        %v614 = vrot.slane %v592, %v613
        %v616 = vunpack.c.l.s4 1966171168
        %v617 = vunpack.c.0.s8 %v616
        %v618 = vlaneseq
        %v619 = vshrl.u32 %v618, 7
        %v620 = vsub.s32 %v617, %v619
        %v621 = vrot.slane %v593, %v620
        %v622 = vcombine.high %v600, %v600
        %v623 = vcombine.high %v607, %v607
        %v624 = vcombine.high %v614, %v614
        %v625 = vcombine.high %v621, %v621
        %v642 = vsel %vm382, %v551, %v523
        %v643 = vsel %vm382, %v565, %v523
        %v644 = vsel %vm382, %v573, %v523
        %v645 = vsel %vm382, %v575, %v523
        %v646 = vsel %vm382, %v558, %v523
        %v647 = vsel %vm382, %v572, %v523
        %v648 = vsel %vm382, %v574, %v523
        %v649 = vsel %vm382, %v576, %v523
        %v650 = vsel %vm382, %v600, %v523
        %v651 = vsel %vm382, %v614, %v523
        %v652 = vsel %vm382, %v622, %v523
        %v653 = vsel %vm382, %v624, %v523
        %v654 = vsel %vm382, %v607, %v523
        %v655 = vsel %vm382, %v621, %v523
        %v656 = vsel %vm382, %v623, %v523
        %v657 = vsel %vm382, %v625, %v523
        %v674 = vcombine.low %v642, %v643
        %v675 = vcombine.low %v644, %v645
        %v677 = vunpack.c.l.s4 1983009808
        %v678 = vunpack.c.0.s8 %v677
        %v679 = vlaneseq
        %v680 = vshrl.u32 %v679, 7
        %v681 = vsub.s32 %v678, %v680
        %v682 = vrot.slane %v674, %v681
        %v684 = vunpack.c.l.s4 1983009808
        %v685 = vunpack.c.0.s8 %v684
        %v686 = vlaneseq
        %v687 = vshrl.u32 %v686, 7
        %v688 = vsub.s32 %v685, %v687
        %v689 = vrot.slane %v675, %v688
        %v690 = vcombine.low %v682, %v689
        %v691 = vcombine.low %v646, %v647
        %v692 = vcombine.low %v648, %v649
        %v694 = vunpack.c.l.s4 1983009808
        %v695 = vunpack.c.0.s8 %v694
        %v696 = vlaneseq
        %v697 = vshrl.u32 %v696, 7
        %v698 = vsub.s32 %v695, %v697
        %v699 = vrot.slane %v691, %v698
        %v701 = vunpack.c.l.s4 1983009808
        %v702 = vunpack.c.0.s8 %v701
        %v703 = vlaneseq
        %v704 = vshrl.u32 %v703, 7
        %v705 = vsub.s32 %v702, %v704
        %v706 = vrot.slane %v692, %v705
        %v707 = vcombine.low %v699, %v706
        %v708 = vcombine.low %v650, %v651
        %v709 = vcombine.low %v652, %v653
        %v711 = vunpack.c.l.s4 1983009808
        %v712 = vunpack.c.0.s8 %v711
        %v713 = vlaneseq
        %v714 = vshrl.u32 %v713, 7
        %v715 = vsub.s32 %v712, %v714
        %v716 = vrot.slane %v708, %v715
        %v718 = vunpack.c.l.s4 1983009808
        %v719 = vunpack.c.0.s8 %v718
        %v720 = vlaneseq
        %v721 = vshrl.u32 %v720, 7
        %v722 = vsub.s32 %v719, %v721
        %v723 = vrot.slane %v709, %v722
        %v724 = vcombine.low %v716, %v723
        %v725 = vcombine.low %v654, %v655
        %v726 = vcombine.low %v656, %v657
        %v728 = vunpack.c.l.s4 1983009808
        %v729 = vunpack.c.0.s8 %v728
        %v730 = vlaneseq
        %v731 = vshrl.u32 %v730, 7
        %v732 = vsub.s32 %v729, %v731
        %v733 = vrot.slane %v725, %v732
        %v735 = vunpack.c.l.s4 1983009808
        %v736 = vunpack.c.0.s8 %v735
        %v737 = vlaneseq
        %v738 = vshrl.u32 %v737, 7
        %v739 = vsub.s32 %v736, %v738
        %v740 = vrot.slane %v726, %v739
        %v741 = vcombine.low %v733, %v740
        %s746 = scalar_lea.vmem %s228, 32
        %747 = vst.msk [vmem:[%s746] sm:$0xff] %vm487, %v690
        %748 = vst.msk [vmem:[%s746 + $0x8] sm:$0xff] %vm487, %v707
        %749 = vst.msk [vmem:[%s746 + $0x10] sm:$0xff] %vm487, %v724
        %750 = vst.msk [vmem:[%s746 + $0x18] sm:$0xff] %vm487, %v741
        %v751 = vld [vmem:[%s220] sm:$0xff]
        %v752 = vld [vmem:[%s220 + $0x8] sm:$0xff]
        %s753 = sld [smem:[#allocation2 + $0x2]]
        %v754 = vstv %s753
        %v755 = vmul.f32 %v751, %v754
        %v756 = vmul.f32 %v752, %v754
        %v757 = vld [vmem:[%s235] sm:$0xff]
        %v758 = vld [vmem:[%s235 + $0x8] sm:$0xff]
        %s759 = sld [smem:[#allocation2 + $0x82]]
        %v760 = vstv %s759
        %v761 = vmul.f32 %v757, %v760
        %v762 = vmul.f32 %v758, %v760
        %v763 = vadd.f32 %v755, %v761
        %v764 = vadd.f32 %v756, %v762
        %v765 = vld [vmem:[%s244] sm:$0xff]
        %v766 = vld [vmem:[%s244 + $0x8] sm:$0xff]
        %s767 = sld [smem:[#allocation2 + $0x102]]
        %v768 = vstv %s767
        %v769 = vmul.f32 %v765, %v768
        %v770 = vmul.f32 %v766, %v768
        %v771 = vadd.f32 %v763, %v769
        %v772 = vadd.f32 %v764, %v770
        %v773 = vld [vmem:[%s253] sm:$0xff]
        %v774 = vld [vmem:[%s253 + $0x8] sm:$0xff]
        %s775 = sld [smem:[#allocation2 + $0x182]]
        %v776 = vstv %s775
        %v777 = vmul.f32 %v773, %v776
        %v778 = vmul.f32 %v774, %v776
        %v779 = vadd.f32 %v771, %v777
        %v780 = vadd.f32 %v772, %v778
        %s781 = sld [smem:[#allocation4 + $0x2]]
        %v782 = vstv %s781
        %v783 = vadd.f32 %v779, %v782
        %v784 = vadd.f32 %v780, %v782
        %v787 = vcombine.high %v783, %v783
        %v789 = vunpack.c.l.s4 1966171168
        %v790 = vunpack.c.0.s8 %v789
        %v791 = vlaneseq
        %v792 = vshrl.u32 %v791, 7
        %v793 = vsub.s32 %v790, %v792
        %v794 = vrot.slane %v783, %v793
        %v796 = vunpack.c.l.s4 1966171168
        %v797 = vunpack.c.0.s8 %v796
        %v798 = vlaneseq
        %v799 = vshrl.u32 %v798, 7
        %v800 = vsub.s32 %v797, %v799
        %v801 = vrot.slane %v787, %v800
        %v802 = vcombine.high %v794, %v794
        %v803 = vcombine.high %v801, %v801
        %v805 = vunpack.c.l.s4 1966171168
        %v806 = vunpack.c.0.s8 %v805
        %v807 = vlaneseq
        %v808 = vshrl.u32 %v807, 7
        %v809 = vsub.s32 %v806, %v808
        %v810 = vrot.slane %v794, %v809
        %v812 = vunpack.c.l.s4 1966171168
        %v813 = vunpack.c.0.s8 %v812
        %v814 = vlaneseq
        %v815 = vshrl.u32 %v814, 7
        %v816 = vsub.s32 %v813, %v815
        %v817 = vrot.slane %v801, %v816
        %v819 = vunpack.c.l.s4 1966171168
        %v820 = vunpack.c.0.s8 %v819
        %v821 = vlaneseq
        %v822 = vshrl.u32 %v821, 7
        %v823 = vsub.s32 %v820, %v822
        %v824 = vrot.slane %v802, %v823
        %v826 = vunpack.c.l.s4 1966171168
        %v827 = vunpack.c.0.s8 %v826
        %v828 = vlaneseq
        %v829 = vshrl.u32 %v828, 7
        %v830 = vsub.s32 %v827, %v829
        %v831 = vrot.slane %v803, %v830
        %v832 = vcombine.high %v810, %v810
        %v833 = vcombine.high %v817, %v817
        %v834 = vcombine.high %v824, %v824
        %v835 = vcombine.high %v831, %v831
        %v836 = vcombine.high %v784, %v784
        %v838 = vunpack.c.l.s4 1966171168
        %v839 = vunpack.c.0.s8 %v838
        %v840 = vlaneseq
        %v841 = vshrl.u32 %v840, 7
        %v842 = vsub.s32 %v839, %v841
        %v843 = vrot.slane %v784, %v842
        %v845 = vunpack.c.l.s4 1966171168
        %v846 = vunpack.c.0.s8 %v845
        %v847 = vlaneseq
        %v848 = vshrl.u32 %v847, 7
        %v849 = vsub.s32 %v846, %v848
        %v850 = vrot.slane %v836, %v849
        %v851 = vcombine.high %v843, %v843
        %v852 = vcombine.high %v850, %v850
        %v854 = vunpack.c.l.s4 1966171168
        %v855 = vunpack.c.0.s8 %v854
        %v856 = vlaneseq
        %v857 = vshrl.u32 %v856, 7
        %v858 = vsub.s32 %v855, %v857
        %v859 = vrot.slane %v843, %v858
        %v861 = vunpack.c.l.s4 1966171168
        %v862 = vunpack.c.0.s8 %v861
        %v863 = vlaneseq
        %v864 = vshrl.u32 %v863, 7
        %v865 = vsub.s32 %v862, %v864
        %v866 = vrot.slane %v850, %v865
        %v868 = vunpack.c.l.s4 1966171168
        %v869 = vunpack.c.0.s8 %v868
        %v870 = vlaneseq
        %v871 = vshrl.u32 %v870, 7
        %v872 = vsub.s32 %v869, %v871
        %v873 = vrot.slane %v851, %v872
        %v875 = vunpack.c.l.s4 1966171168
        %v876 = vunpack.c.0.s8 %v875
        %v877 = vlaneseq
        %v878 = vshrl.u32 %v877, 7
        %v879 = vsub.s32 %v876, %v878
        %v880 = vrot.slane %v852, %v879
        %v881 = vcombine.high %v859, %v859
        %v882 = vcombine.high %v866, %v866
        %v883 = vcombine.high %v873, %v873
        %v884 = vcombine.high %v880, %v880
        %v901 = vsel %vm382, %v810, %v782
        %v902 = vsel %vm382, %v824, %v782
        %v903 = vsel %vm382, %v832, %v782
        %v904 = vsel %vm382, %v834, %v782
        %v905 = vsel %vm382, %v817, %v782
        %v906 = vsel %vm382, %v831, %v782
        %v907 = vsel %vm382, %v833, %v782
        %v908 = vsel %vm382, %v835, %v782
        %v909 = vsel %vm382, %v859, %v782
        %v910 = vsel %vm382, %v873, %v782
        %v911 = vsel %vm382, %v881, %v782
        %v912 = vsel %vm382, %v883, %v782
        %v913 = vsel %vm382, %v866, %v782
        %v914 = vsel %vm382, %v880, %v782
        %v915 = vsel %vm382, %v882, %v782
        %v916 = vsel %vm382, %v884, %v782
        %v933 = vcombine.low %v901, %v902
        %v934 = vcombine.low %v903, %v904
        %v936 = vunpack.c.l.s4 1983009808
        %v937 = vunpack.c.0.s8 %v936
        %v938 = vlaneseq
        %v939 = vshrl.u32 %v938, 7
        %v940 = vsub.s32 %v937, %v939
        %v941 = vrot.slane %v933, %v940
        %v943 = vunpack.c.l.s4 1983009808
        %v944 = vunpack.c.0.s8 %v943
        %v945 = vlaneseq
        %v946 = vshrl.u32 %v945, 7
        %v947 = vsub.s32 %v944, %v946
        %v948 = vrot.slane %v934, %v947
        %v949 = vcombine.low %v941, %v948
        %v950 = vcombine.low %v905, %v906
        %v951 = vcombine.low %v907, %v908
        %v953 = vunpack.c.l.s4 1983009808
        %v954 = vunpack.c.0.s8 %v953
        %v955 = vlaneseq
        %v956 = vshrl.u32 %v955, 7
        %v957 = vsub.s32 %v954, %v956
        %v958 = vrot.slane %v950, %v957
        %v960 = vunpack.c.l.s4 1983009808
        %v961 = vunpack.c.0.s8 %v960
        %v962 = vlaneseq
        %v963 = vshrl.u32 %v962, 7
        %v964 = vsub.s32 %v961, %v963
        %v965 = vrot.slane %v951, %v964
        %v966 = vcombine.low %v958, %v965
        %v967 = vcombine.low %v909, %v910
        %v968 = vcombine.low %v911, %v912
        %v970 = vunpack.c.l.s4 1983009808
        %v971 = vunpack.c.0.s8 %v970
        %v972 = vlaneseq
        %v973 = vshrl.u32 %v972, 7
        %v974 = vsub.s32 %v971, %v973
        %v975 = vrot.slane %v967, %v974
        %v977 = vunpack.c.l.s4 1983009808
        %v978 = vunpack.c.0.s8 %v977
        %v979 = vlaneseq
        %v980 = vshrl.u32 %v979, 7
        %v981 = vsub.s32 %v978, %v980
        %v982 = vrot.slane %v968, %v981
        %v983 = vcombine.low %v975, %v982
        %v984 = vcombine.low %v913, %v914
        %v985 = vcombine.low %v915, %v916
        %v987 = vunpack.c.l.s4 1983009808
        %v988 = vunpack.c.0.s8 %v987
        %v989 = vlaneseq
        %v990 = vshrl.u32 %v989, 7
        %v991 = vsub.s32 %v988, %v990
        %v992 = vrot.slane %v984, %v991
        %v994 = vunpack.c.l.s4 1983009808
        %v995 = vunpack.c.0.s8 %v994
        %v996 = vlaneseq
        %v997 = vshrl.u32 %v996, 7
        %v998 = vsub.s32 %v995, %v997
        %v999 = vrot.slane %v985, %v998
        %v1000 = vcombine.low %v992, %v999
        %s1005 = scalar_lea.vmem %s228, 64
        %1006 = vst.msk [vmem:[%s1005] sm:$0xff] %vm487, %v949
        %1007 = vst.msk [vmem:[%s1005 + $0x8] sm:$0xff] %vm487, %v966
        %1008 = vst.msk [vmem:[%s1005 + $0x10] sm:$0xff] %vm487, %v983
        %1009 = vst.msk [vmem:[%s1005 + $0x18] sm:$0xff] %vm487, %v1000
        %v1010 = vld [vmem:[%s220] sm:$0xff]
        %v1011 = vld [vmem:[%s220 + $0x8] sm:$0xff]
        %s1012 = sld [smem:[#allocation2 + $0x3]]
        %v1013 = vstv %s1012
        %v1014 = vmul.f32 %v1010, %v1013
        %v1015 = vmul.f32 %v1011, %v1013
        %v1016 = vld [vmem:[%s235] sm:$0xff]
        %v1017 = vld [vmem:[%s235 + $0x8] sm:$0xff]
        %s1018 = sld [smem:[#allocation2 + $0x83]]
        %v1019 = vstv %s1018
        %v1020 = vmul.f32 %v1016, %v1019
        %v1021 = vmul.f32 %v1017, %v1019
        %v1022 = vadd.f32 %v1014, %v1020
        %v1023 = vadd.f32 %v1015, %v1021
        %v1024 = vld [vmem:[%s244] sm:$0xff]
        %v1025 = vld [vmem:[%s244 + $0x8] sm:$0xff]
        %s1026 = sld [smem:[#allocation2 + $0x103]]
        %v1027 = vstv %s1026
        %v1028 = vmul.f32 %v1024, %v1027
        %v1029 = vmul.f32 %v1025, %v1027
        %v1030 = vadd.f32 %v1022, %v1028
        %v1031 = vadd.f32 %v1023, %v1029
        %v1032 = vld [vmem:[%s253] sm:$0xff]
        %v1033 = vld [vmem:[%s253 + $0x8] sm:$0xff]
        %s1034 = sld [smem:[#allocation2 + $0x183]]
        %v1035 = vstv %s1034
        %v1036 = vmul.f32 %v1032, %v1035
        %v1037 = vmul.f32 %v1033, %v1035
        %v1038 = vadd.f32 %v1030, %v1036
        %v1039 = vadd.f32 %v1031, %v1037
        %s1040 = sld [smem:[#allocation4 + $0x3]]
        %v1041 = vstv %s1040
        %v1042 = vadd.f32 %v1038, %v1041
        %v1043 = vadd.f32 %v1039, %v1041
        %v1046 = vcombine.high %v1042, %v1042
        %v1048 = vunpack.c.l.s4 1966171168
        %v1049 = vunpack.c.0.s8 %v1048
        %v1050 = vlaneseq
        %v1051 = vshrl.u32 %v1050, 7
        %v1052 = vsub.s32 %v1049, %v1051
        %v1053 = vrot.slane %v1042, %v1052
        %v1055 = vunpack.c.l.s4 1966171168
        %v1056 = vunpack.c.0.s8 %v1055
        %v1057 = vlaneseq
        %v1058 = vshrl.u32 %v1057, 7
        %v1059 = vsub.s32 %v1056, %v1058
        %v1060 = vrot.slane %v1046, %v1059
        %v1061 = vcombine.high %v1053, %v1053
        %v1062 = vcombine.high %v1060, %v1060
        %v1064 = vunpack.c.l.s4 1966171168
        %v1065 = vunpack.c.0.s8 %v1064
        %v1066 = vlaneseq
        %v1067 = vshrl.u32 %v1066, 7
        %v1068 = vsub.s32 %v1065, %v1067
        %v1069 = vrot.slane %v1053, %v1068
        %v1071 = vunpack.c.l.s4 1966171168
        %v1072 = vunpack.c.0.s8 %v1071
        %v1073 = vlaneseq
        %v1074 = vshrl.u32 %v1073, 7
        %v1075 = vsub.s32 %v1072, %v1074
        %v1076 = vrot.slane %v1060, %v1075
        %v1078 = vunpack.c.l.s4 1966171168
        %v1079 = vunpack.c.0.s8 %v1078
        %v1080 = vlaneseq
        %v1081 = vshrl.u32 %v1080, 7
        %v1082 = vsub.s32 %v1079, %v1081
        %v1083 = vrot.slane %v1061, %v1082
        %v1085 = vunpack.c.l.s4 1966171168
        %v1086 = vunpack.c.0.s8 %v1085
        %v1087 = vlaneseq
        %v1088 = vshrl.u32 %v1087, 7
        %v1089 = vsub.s32 %v1086, %v1088
        %v1090 = vrot.slane %v1062, %v1089
        %v1091 = vcombine.high %v1069, %v1069
        %v1092 = vcombine.high %v1076, %v1076
        %v1093 = vcombine.high %v1083, %v1083
        %v1094 = vcombine.high %v1090, %v1090
        %v1095 = vcombine.high %v1043, %v1043
        %v1097 = vunpack.c.l.s4 1966171168
        %v1098 = vunpack.c.0.s8 %v1097
        %v1099 = vlaneseq
        %v1100 = vshrl.u32 %v1099, 7
        %v1101 = vsub.s32 %v1098, %v1100
        %v1102 = vrot.slane %v1043, %v1101
        %v1104 = vunpack.c.l.s4 1966171168
        %v1105 = vunpack.c.0.s8 %v1104
        %v1106 = vlaneseq
        %v1107 = vshrl.u32 %v1106, 7
        %v1108 = vsub.s32 %v1105, %v1107
        %v1109 = vrot.slane %v1095, %v1108
        %v1110 = vcombine.high %v1102, %v1102
        %v1111 = vcombine.high %v1109, %v1109
        %v1113 = vunpack.c.l.s4 1966171168
        %v1114 = vunpack.c.0.s8 %v1113
        %v1115 = vlaneseq
        %v1116 = vshrl.u32 %v1115, 7
        %v1117 = vsub.s32 %v1114, %v1116
        %v1118 = vrot.slane %v1102, %v1117
        %v1120 = vunpack.c.l.s4 1966171168
        %v1121 = vunpack.c.0.s8 %v1120
        %v1122 = vlaneseq
        %v1123 = vshrl.u32 %v1122, 7
        %v1124 = vsub.s32 %v1121, %v1123
        %v1125 = vrot.slane %v1109, %v1124
        %v1127 = vunpack.c.l.s4 1966171168
        %v1128 = vunpack.c.0.s8 %v1127
        %v1129 = vlaneseq
        %v1130 = vshrl.u32 %v1129, 7
        %v1131 = vsub.s32 %v1128, %v1130
        %v1132 = vrot.slane %v1110, %v1131
        %v1134 = vunpack.c.l.s4 1966171168
        %v1135 = vunpack.c.0.s8 %v1134
        %v1136 = vlaneseq
        %v1137 = vshrl.u32 %v1136, 7
        %v1138 = vsub.s32 %v1135, %v1137
        %v1139 = vrot.slane %v1111, %v1138
        %v1140 = vcombine.high %v1118, %v1118
        %v1141 = vcombine.high %v1125, %v1125
        %v1142 = vcombine.high %v1132, %v1132
        %v1143 = vcombine.high %v1139, %v1139
        %v1160 = vsel %vm382, %v1069, %v1041
        %v1161 = vsel %vm382, %v1083, %v1041
        %v1162 = vsel %vm382, %v1091, %v1041
        %v1163 = vsel %vm382, %v1093, %v1041
        %v1164 = vsel %vm382, %v1076, %v1041
        %v1165 = vsel %vm382, %v1090, %v1041
        %v1166 = vsel %vm382, %v1092, %v1041
        %v1167 = vsel %vm382, %v1094, %v1041
        %v1168 = vsel %vm382, %v1118, %v1041
        %v1169 = vsel %vm382, %v1132, %v1041
        %v1170 = vsel %vm382, %v1140, %v1041
        %v1171 = vsel %vm382, %v1142, %v1041
        %v1172 = vsel %vm382, %v1125, %v1041
        %v1173 = vsel %vm382, %v1139, %v1041
        %v1174 = vsel %vm382, %v1141, %v1041
        %v1175 = vsel %vm382, %v1143, %v1041
        %v1192 = vcombine.low %v1160, %v1161
        %v1193 = vcombine.low %v1162, %v1163
        %v1195 = vunpack.c.l.s4 1983009808
        %v1196 = vunpack.c.0.s8 %v1195
        %v1197 = vlaneseq
        %v1198 = vshrl.u32 %v1197, 7
        %v1199 = vsub.s32 %v1196, %v1198
        %v1200 = vrot.slane %v1192, %v1199
        %v1202 = vunpack.c.l.s4 1983009808
        %v1203 = vunpack.c.0.s8 %v1202
        %v1204 = vlaneseq
        %v1205 = vshrl.u32 %v1204, 7
        %v1206 = vsub.s32 %v1203, %v1205
        %v1207 = vrot.slane %v1193, %v1206
        %v1208 = vcombine.low %v1200, %v1207
        %v1209 = vcombine.low %v1164, %v1165
        %v1210 = vcombine.low %v1166, %v1167
        %v1212 = vunpack.c.l.s4 1983009808
        %v1213 = vunpack.c.0.s8 %v1212
        %v1214 = vlaneseq
        %v1215 = vshrl.u32 %v1214, 7
        %v1216 = vsub.s32 %v1213, %v1215
        %v1217 = vrot.slane %v1209, %v1216
        %v1219 = vunpack.c.l.s4 1983009808
        %v1220 = vunpack.c.0.s8 %v1219
        %v1221 = vlaneseq
        %v1222 = vshrl.u32 %v1221, 7
        %v1223 = vsub.s32 %v1220, %v1222
        %v1224 = vrot.slane %v1210, %v1223
        %v1225 = vcombine.low %v1217, %v1224
        %v1226 = vcombine.low %v1168, %v1169
        %v1227 = vcombine.low %v1170, %v1171
        %v1229 = vunpack.c.l.s4 1983009808
        %v1230 = vunpack.c.0.s8 %v1229
        %v1231 = vlaneseq
        %v1232 = vshrl.u32 %v1231, 7
        %v1233 = vsub.s32 %v1230, %v1232
        %v1234 = vrot.slane %v1226, %v1233
        %v1236 = vunpack.c.l.s4 1983009808
        %v1237 = vunpack.c.0.s8 %v1236
        %v1238 = vlaneseq
        %v1239 = vshrl.u32 %v1238, 7
        %v1240 = vsub.s32 %v1237, %v1239
        %v1241 = vrot.slane %v1227, %v1240
        %v1242 = vcombine.low %v1234, %v1241
        %v1243 = vcombine.low %v1172, %v1173
        %v1244 = vcombine.low %v1174, %v1175
        %v1246 = vunpack.c.l.s4 1983009808
        %v1247 = vunpack.c.0.s8 %v1246
        %v1248 = vlaneseq
        %v1249 = vshrl.u32 %v1248, 7
        %v1250 = vsub.s32 %v1247, %v1249
        %v1251 = vrot.slane %v1243, %v1250
        %v1253 = vunpack.c.l.s4 1983009808
        %v1254 = vunpack.c.0.s8 %v1253
        %v1255 = vlaneseq
        %v1256 = vshrl.u32 %v1255, 7
        %v1257 = vsub.s32 %v1254, %v1256
        %v1258 = vrot.slane %v1244, %v1257
        %v1259 = vcombine.low %v1251, %v1258
        %s1264 = scalar_lea.vmem %s228, 96
        %1265 = vst.msk [vmem:[%s1264] sm:$0xff] %vm487, %v1208
        %1266 = vst.msk [vmem:[%s1264 + $0x8] sm:$0xff] %vm487, %v1225
        %1267 = vst.msk [vmem:[%s1264 + $0x10] sm:$0xff] %vm487, %v1242
        %1268 = vst.msk [vmem:[%s1264 + $0x18] sm:$0xff] %vm487, %v1259
        %p1269 = scmp.lt.s32.totalorder %s20, 1
        %s1270 = scalar_select %p1269, %s20, 1
        %p1271 = scmp.lt.s32.totalorder %s21, 0
        %s1272 = scalar_select %p1271, %s21, 0
        %s1273 = smul.addr %s1270, 16
        %s1274 = sadd.s32 %s1272, %s1273
        %s1275 = smul.addr %s1274, 8
        %s1276 = scalar_lea.vmem %s3, %s1275
        // Predicated region
        $region41: #{tpu_custom_call.1} parent=31 // pred_check
          %p1277 = pneg %p118
        $region42: #{tpu_custom_call.1} parent=31 // pred_check_branch
          %1279 = sbr.rel (%p1277) target = $region44
        $region43: #{tpu_custom_call.1} parent=31 // pred_region
          _
        $region44: #{tpu_custom_call.1} parent=31 // pred_fallthru
          _
      $region32: #{tpu_custom_call.1} parent=5 // pred_fallthru
        _
      %p1280 = scmp.le.s32.totalorder 2, %s11
      // Predicated region
      $region45: #{tpu_custom_call.1} parent=5 // pred_check
        %p1281 = pneg %p1280
      $region46: #{tpu_custom_call.1} parent=5 // pred_check_branch
        %1283 = sbr.rel (%p1281) target = $region48
      $region47: #{tpu_custom_call.1} parent=5 // pred_region
        %s1284 = ssub.s32 %s11, 2
        // Predicated region
        $region49: #{tpu_custom_call.1} parent=47 // pred_check
          %p1285 = pneg %p124
        $region50: #{tpu_custom_call.1} parent=47 // pred_check_branch
          %1287 = sbr.rel (%p1285) target = $region52
        $region51: #{tpu_custom_call.1} parent=47 // pred_region
          %p1288 = scmp.lt.s32.totalorder %s22, 1
          %s1289 = scalar_select %p1288, %s22, 1
          %p1290 = scmp.lt.s32.totalorder %s23, 0
          %s1291 = scalar_select %p1290, %s23, 0
          %s1292 = smul.addr %s1289, 16
          %s1293 = sadd.s32 %s1291, %s1292
          %s1294 = smul.addr %s1293, 8
          %s1295 = scalar_lea.vmem %s3, %s1294
        $region52: #{tpu_custom_call.1} parent=47 // pred_fallthru
          _
      $region48: #{tpu_custom_call.1} parent=5 // pred_fallthru
        _
    $region6: #{tpu_custom_call.1} parent=1 // loop_footer
      %s15 = sadd.s32 1, %s11
    $region7: #{tpu_custom_call.1} parent=1 // loop_footer_branch
      %10 = sbr.rel target = $region3
    $region8: #{tpu_custom_call.1} parent=1 // loop_exit
      _
    %1296 = vsyncpa [#allocation3], 1
    %s1297 = scalar_lea.sflag [#allocation3], 1
    %1298 = vsyncpa %s1297, 1
    %1299 = vsyncpa [#allocation5], 1

</llo_original>
